<compile_context>
chip_gen: v7x
topology: tpu7x:2x2x1
jax: 0.10.0
libtpu: 0.0.40
codegen_flags: <defaults>
</compile_context>

<pallas_src>
import functools
import math

import jax
import jax.numpy as jnp
from jax import lax
from jax.experimental import pallas as pl
from jax.experimental.pallas import tpu as pltpu


def _vmem_limit_bytes():
    """Generation-aware scoped-VMEM budget: ~75% of physical, capped at 110 MiB."""
    cap = 64 * 1024 * 1024
    try:
        cap = int(getattr(pltpu.get_tpu_info(), "vmem_capacity_bytes", cap))
    except Exception:
        pass
    return int(max(min((cap * 3) // 4, 110 * 1024 * 1024), 32 * 1024 * 1024))


_VMEM_LIMIT = _vmem_limit_bytes()


def _pick_tile(dim, target, quantum):
    """Largest multiple of `quantum` dividing `dim` that is <= target, else dim."""
    if dim <= target:
        return dim
    t = (target // quantum) * quantum
    while t >= quantum:
        if dim % t == 0:
            return t
        t -= quantum
    return dim


# ---------------------------------------------------------------------------
# 1) QKV projection, fused head split.
#    Grid (B, T//tm, H), h innermost so the x tile is NOT re-DMA'd across heads
#    (the per-head weight block is the one re-streamed; tm is raised to keep
#    the number of weight passes small).
#    Output layout: (3, B, H, T, hd)  -- exactly what flash attention reads.
# ---------------------------------------------------------------------------
def _qkv_kernel(x_ref, w_ref, b_ref, o_ref):
    x = x_ref[0].astype(jnp.bfloat16)                    # (tm, C) -> bf16 for MXU
    for g in range(3):                                   # q, k, v (static unroll)
        w = w_ref[g, 0]                                  # (C, hd) bf16
        o_ref[g, 0, 0] = (
            jnp.dot(x, w, preferred_element_type=jnp.float32) + b_ref[g, 0]
        ).astype(o_ref.dtype)


def _qkv_projection(x, w_qkv, b_qkv, n_head):
    B, T, C = x.shape
    H = n_head
    hd = C // H
    # One-off parameter repack at trace time: (C, 3C) -> (3, H, C, hd), bf16.
    w3 = w_qkv.reshape(C, 3, H, hd).transpose(1, 2, 0, 3).astype(jnp.bfloat16)
    b3 = b_qkv.reshape(3, H, 1, hd).astype(jnp.float32)

    tm = _pick_tile(T, 512, 16)
    grid = (B, T // tm, H)
    # TODO(synk): for very large C (v7x, 64 MiB VMEM) add a K (C_in) reduction
    # grid axis with an f32 accumulator instead of loading full (C, hd) columns.

    flops = 2 * B * T * C * 3 * C
    bytes_accessed = (x.size * x.dtype.itemsize + w3.size * 2 + b3.size * 4
                      + 3 * B * H * T * hd * 2)

    return pl.pallas_call(
        _qkv_kernel,
        out_shape=jax.ShapeDtypeStruct((3, B, H, T, hd), jnp.bfloat16),
        grid=grid,
        in_specs=[
            pl.BlockSpec((1, tm, C), lambda b, i, h: (b, i, 0)),
            pl.BlockSpec((3, 1, C, hd), lambda b, i, h: (0, h, 0, 0)),
            pl.BlockSpec((3, 1, 1, hd), lambda b, i, h: (0, h, 0, 0)),
        ],
        out_specs=pl.BlockSpec((3, 1, 1, tm, hd), lambda b, i, h: (0, b, h, i, 0)),
        compiler_params=pltpu.CompilerParams(
            dimension_semantics=("parallel", "parallel", "parallel"),
            vmem_limit_bytes=_VMEM_LIMIT,
        ),
        cost_estimate=pl.CostEstimate(flops=int(flops), transcendentals=0,
                                      bytes_accessed=int(bytes_accessed)),
    )(x, w3, b3)


# ---------------------------------------------------------------------------
# 2) Flash attention (causal, online softmax).
#    Grid (B, H, T//tq, T//tkv); kv axis is "arbitrary" and carries m/l/acc in
#    VMEM scratch.  Fully-visible tiles take a mask-free path; fully-masked
#    tiles are skipped AND their K/V DMAs are elided via clamped index maps.
# ---------------------------------------------------------------------------
def _flash_attn_kernel(q_ref, k_ref, v_ref, o_ref, m_sc, l_sc, acc_sc,
                       *, tq, tkv, scale):
    ki = pl.program_id(3)
    n_kv = pl.num_programs(3)

    @pl.when(ki == 0)
    def _init():
        m_sc[...] = jnp.full(m_sc.shape, -jnp.inf, m_sc.dtype)
        l_sc[...] = jnp.zeros(l_sc.shape, l_sc.dtype)
        acc_sc[...] = jnp.zeros(acc_sc.shape, acc_sc.dtype)

    q_start = pl.program_id(2) * tq
    kv_start = ki * tkv

    def scores():
        q = q_ref[0, 0, 0].astype(jnp.bfloat16)          # (tq, hd)
        k = k_ref[0, 0, 0].astype(jnp.bfloat16)          # (tkv, hd)
        # Contract over the last dim of both operands: no K transpose (no XLU).
        s = lax.dot_general(q, k, (((1,), (1,)), ((), ())),
                            preferred_element_type=jnp.float32)
        return s * scale                                  # (tq, tkv) f32

    def online_update(s):
        m_prev = m_sc[...]
        m_new = jnp.maximum(m_prev, jnp.max(s, axis=-1, keepdims=True))
        alpha = jnp.exp(m_prev - m_new)
        p = jnp.exp(s - m_new)
        l_sc[...] = alpha * l_sc[...] + jnp.sum(p, axis=-1, keepdims=True)
        v = v_ref[0, 0, 0].astype(jnp.bfloat16)
        acc_sc[...] = alpha * acc_sc[...] + jnp.dot(
            p.astype(jnp.bfloat16), v, preferred_element_type=jnp.float32)
        m_sc[...] = m_new

    # Fast path: kv tile entirely at/below the diagonal -> no iotas, no mask.
    @pl.when(kv_start + (tkv - 1) <= q_start)
    def _full_tile():
        online_update(scores())

    # Diagonal path: tile straddles the diagonal -> per-tile causal mask.
    @pl.when((kv_start + (tkv - 1) > q_start) & (kv_start <= q_start + (tq - 1)))
    def _diag_tile():
        s = scores()
        row = q_start + lax.broadcasted_iota(jnp.int32, (tq, tkv), 0)
        col = kv_start + lax.broadcasted_iota(jnp.int32, (tq, tkv), 1)
        online_update(jnp.where(col <= row, s, -1e30))

    # Fully-masked tiles take neither branch (and DMA nothing new: clamped maps).

    @pl.when(ki == n_kv - 1)
    def _finalize():
        inv_l = pl.reciprocal(l_sc[...], approx=True)     # EUP, not VALU divide
        o_ref[0, 0] = (acc_sc[...] * inv_l).astype(o_ref.dtype)


def _flash_attention(qkv, *, tq, tkv):
    three, B, H, T, hd = qkv.shape
    assert three == 3
    scale = 1.0 / math.sqrt(hd)
    # v7x megacore: parallel extent is B*H*(T//tq); keep it >= 2 (it is here).
    grid = (B, H, T // tq, T // tkv)

    def q_map(b, h, qi, ki):
        return (0, b, h, qi, 0)

    def kv_map(group):
        def _map(b, h, qi, ki):
            # Clamp to the last causally useful kv tile: skipped steps repeat
            # the previous block index so Pallas does not re-DMA K/V.
            last_needed = ((qi + 1) * tq - 1) // tkv
            return (group, b, h, jnp.minimum(ki, last_needed), 0)
        return _map

    kernel = functools.partial(_flash_attn_kernel, tq=tq, tkv=tkv, scale=scale)

    flops = 2 * B * H * T * T * hd                 # ~causal half of 4*B*H*T^2*hd
    bytes_accessed = 4 * B * H * T * hd * qkv.dtype.itemsize

    return pl.pallas_call(
        kernel,
        out_shape=jax.ShapeDtypeStruct((B, H, T, hd), qkv.dtype),
        grid=grid,
        in_specs=[
            pl.BlockSpec((1, 1, 1, tq, hd), q_map),
            pl.BlockSpec((1, 1, 1, tkv, hd), kv_map(1)),
            pl.BlockSpec((1, 1, 1, tkv, hd), kv_map(2)),
        ],
        out_specs=pl.BlockSpec((1, 1, tq, hd), lambda b, h, qi, ki: (b, h, qi, 0)),
        scratch_shapes=[
            pltpu.VMEM((tq, 1), jnp.float32),      # running max   m
            pltpu.VMEM((tq, 1), jnp.float32),      # running denom l
            pltpu.VMEM((tq, hd), jnp.float32),     # output accumulator
        ],
        compiler_params=pltpu.CompilerParams(
            dimension_semantics=("parallel", "parallel", "parallel", "arbitrary"),
            vmem_limit_bytes=_VMEM_LIMIT,
        ),
        cost_estimate=pl.CostEstimate(
            flops=int(flops),
            transcendentals=int(B * H * T * T // 2 + 1),
            bytes_accessed=int(bytes_accessed)),
    )(qkv, qkv, qkv)


# ---------------------------------------------------------------------------
# 3) Output projection with the head merge fused in as a reduction grid axis:
#    out[b, t, :] = sum_h y[b, h, t, :] @ W_proj[h*hd:(h+1)*hd, :] + bias.
#    No (B,H,T,hd) -> (B,T,C) transpose; lane-dense (tm, tn) output stores.
# ---------------------------------------------------------------------------
def _merge_proj_kernel(y_ref, w_ref, b_ref, o_ref, acc_ref):
    h = pl.program_id(3)

    @pl.when(h == 0)
    def _init():
        acc_ref[...] = jnp.zeros(acc_ref.shape, acc_ref.dtype)

    acc_ref[...] += jnp.dot(y_ref[0, 0].astype(jnp.bfloat16), w_ref[0],
                            preferred_element_type=jnp.float32)

    @pl.when(h == pl.num_programs(3) - 1)
    def _finalize():
        o_ref[0] = (acc_ref[...] + b_ref[...]).astype(o_ref.dtype)


def _merge_and_project(y, w_proj, b_proj, out_dtype):
    B, H, T, hd = y.shape
    C = H * hd
    N = w_proj.shape[1]
    w3 = w_proj.reshape(H, hd, N).astype(jnp.bfloat16)   # one-off repack, bf16
    b2 = b_proj.reshape(1, N).astype(jnp.float32)

    tm = _pick_tile(T, 512, 16)
    tn = _pick_tile(N, 512, 128)
    grid = (B, T // tm, N // tn, H)                      # head axis = reduction

    flops = 2 * B * T * C * N
    bytes_accessed = (y.size * y.dtype.itemsize + w3.size * 2
                      + B * T * N * jnp.dtype(out_dtype).itemsize)

    return pl.pallas_call(
        _merge_proj_kernel,
        out_shape=jax.ShapeDtypeStruct((B, T, N), out_dtype),
        grid=grid,
        in_specs=[
            pl.BlockSpec((1, 1, tm, hd), lambda b, i, j, h: (b, h, i, 0)),
            pl.BlockSpec((1, hd, tn), lambda b, i, j, h: (h, 0, j)),
            pl.BlockSpec((1, tn), lambda b, i, j, h: (0, j)),
        ],
        out_specs=pl.BlockSpec((1, tm, tn), lambda b, i, j, h: (b, i, j)),
        scratch_shapes=[pltpu.VMEM((tm, tn), jnp.float32)],
        compiler_params=pltpu.CompilerParams(
            dimension_semantics=("parallel", "parallel", "parallel", "arbitrary"),
            vmem_limit_bytes=_VMEM_LIMIT,
        ),
        cost_estimate=pl.CostEstimate(flops=int(flops), transcendentals=0,
                                      bytes_accessed=int(bytes_accessed)),
    )(y, w3, b2)


# ---------------------------------------------------------------------------
# Module: CausalSelfAttention.forward
# ---------------------------------------------------------------------------
def causal_self_attention(x, params, n_head, *, tq=None, tkv=None):
    B, T, C = x.shape
    assert C % n_head == 0

    # 1) qkv projection, output already head-split: (3, B, H, T, hd) bf16.
    qkv = _qkv_projection(x, params["w_qkv"], params["b_qkv"], n_head)

    # 2) causal flash attention with online softmax (bf16 MXU, f32 stats).
    if tq is None:
        tq = _pick_tile(T, 256, 16)
    if tkv is None:
        tkv = _pick_tile(T, 512, 16)
    assert T % tq == 0 and T % tkv == 0
    y = _flash_attention(qkv, tq=tq, tkv=tkv)            # (B, H, T, hd) bf16

    # TODO(synk): self.d1 = nn.Dropout(config.dropout) is identity (eval / p=0).

    # 3) head merge + output projection fused via a head-reduction grid axis.
    return _merge_and_project(y, params["w_proj"], params["b_proj"], x.dtype)


# ---------------------------------------------------------------------------
# Pure-JAX fp32 reference (matches the PyTorch module semantics).
# ---------------------------------------------------------------------------
def _reference(x, params, n_head):
    B, T, C = x.shape
    hd = C // n_head
    qkv = x @ params["w_qkv"] + params["b_qkv"]
    q, k, v = jnp.split(qkv, 3, axis=-1)
    q = q.reshape(B, T, n_head, hd).transpose(0, 2, 1, 3)
    k = k.reshape(B, T, n_head, hd).transpose(0, 2, 1, 3)
    v = v.reshape(B, T, n_head, hd).transpose(0, 2, 1, 3)
    s = jnp.einsum("bhqd,bhkd->bhqk", q, k) / math.sqrt(hd)
    mask = jnp.tril(jnp.ones((T, T), bool))
    s = jnp.where(mask, s, -jnp.inf)
    p = jax.nn.softmax(s, axis=-1)
    y = jnp.einsum("bhqk,bhkd->bhqd", p, v)
    y = y.transpose(0, 2, 1, 3).reshape(B, T, C)
    return y @ params["w_proj"] + params["b_proj"]


def _make_params(key, C):
    k1, k2, k3, k4 = jax.random.split(key, 4)
    return {
        # Weights stored as (in, out) == PyTorch Linear weight transposed.
        "w_qkv": 0.02 * jax.random.normal(k1, (C, 3 * C), jnp.float32),
        "b_qkv": 0.01 * jax.random.normal(k2, (3 * C,), jnp.float32),
        "w_proj": 0.02 * jax.random.normal(k3, (C, C), jnp.float32),
        "b_proj": 0.01 * jax.random.normal(k4, (C,), jnp.float32),
    }


if __name__ == "__main__":
    key = jax.random.PRNGKey(0)
    k0, k1, k2, k3 = jax.random.split(key, 4)

    # Case 1: small shapes matching the module (single-tile paths).
    B, T, C, n_head = 2, 8, 32, 4
    x = jax.random.normal(k0, (B, T, C), jnp.float32)
    params = _make_params(k1, C)
    out = causal_self_attention(x, params, n_head)
    jax.block_until_ready(out)
    assert out.shape == (B, T, C)
    ref = _reference(x, params, n_head)
    err = float(jnp.max(jnp.abs(out - ref)))
    assert jnp.allclose(out, ref, atol=5e-3, rtol=5e-2), f"max abs err = {err}"

    # Case 2: multi-tile causal paths (full / diagonal / dead kv tiles,
    # clamped K/V index maps, multi-step online softmax).
    B2, T2, C2, n_head2 = 2, 64, 64, 4
    x2 = jax.random.normal(k2, (B2, T2, C2), jnp.float32)
    params2 = _make_params(k3, C2)
    out2 = causal_self_attention(x2, params2, n_head2, tq=16, tkv=32)
    jax.block_until_ready(out2)
    ref2 = _reference(x2, params2, n_head2)
    err2 = float(jnp.max(jnp.abs(out2 - ref2)))
    assert jnp.allclose(out2, ref2, atol=5e-3, rtol=5e-2), f"max abs err = {err2}"

    print("KERNEL_OK")
</pallas_src>

<mosaic_0001>
module attributes {stable_mosaic.version = 11 : i64} {
  func.func @_qkv_kernel(%arg0: i32, %arg1: i32, %arg2: i32, %arg3: memref<1x8x32xf32, #tpu.memory_space<vmem>>, %arg4: memref<3x1x32x8xbf16, #tpu.memory_space<vmem>>, %arg5: memref<3x1x1x8xf32, #tpu.memory_space<vmem>>, %arg6: memref<3x1x1x8x8xbf16, #tpu.memory_space<vmem>>) attributes {dimension_semantics = [#tpu.dimension_semantics<parallel>, #tpu.dimension_semantics<parallel>, #tpu.dimension_semantics<parallel>], iteration_bounds = array<i64: 2, 1, 4>, scalar_prefetch = 0 : i64, scratch_operands = 0 : i64, tpu.core_type = #tpu.core_type<tc>, window_params = [{transform_indices = @transform_0, window_bounds = array<i64: 1, 8, 32>}, {transform_indices = @transform_1, window_bounds = array<i64: 3, 1, 32, 8>}, {transform_indices = @transform_2, window_bounds = array<i64: 3, 1, 1, 8>}, {transform_indices = @transform_3, window_bounds = array<i64: 3, 1, 1, 8, 8>}]} {
    %c0 = arith.constant 0 : index
    %c0_0 = arith.constant 0 : index
    %c0_1 = arith.constant 0 : index
    %0 = vector.load %arg3[%c0, %c0_0, %c0_1] : memref<1x8x32xf32, #tpu.memory_space<vmem>>, vector<1x8x32xf32>
    %1 = vector.shape_cast %0 : vector<1x8x32xf32> to vector<8x32xf32>
    %2 = arith.truncf %1 : vector<8x32xf32> to vector<8x32xbf16>
    %c0_2 = arith.constant 0 : index
    %c0_3 = arith.constant 0 : index
    %c0_4 = arith.constant 0 : index
    %c0_5 = arith.constant 0 : index
    %3 = vector.load %arg4[%c0_2, %c0_3, %c0_4, %c0_5] : memref<3x1x32x8xbf16, #tpu.memory_space<vmem>>, vector<1x1x32x8xbf16>
    %4 = vector.shape_cast %3 : vector<1x1x32x8xbf16> to vector<32x8xbf16>
    %cst = arith.constant dense<0.000000e+00> : vector<8x8xf32>
    %5 = tpu.matmul %2, %4, %cst {dimension_numbers = #tpu.dot_dimension_numbers<[1], [0], [0], [1], [0, 0, 1, 1], [], []>} : vector<8x32xbf16>, vector<32x8xbf16>, vector<8x8xf32> -> vector<8x8xf32>
    %c0_6 = arith.constant 0 : index
    %c0_7 = arith.constant 0 : index
    %c0_8 = arith.constant 0 : index
    %c0_9 = arith.constant 0 : index
    %6 = vector.load %arg5[%c0_6, %c0_7, %c0_8, %c0_9] : memref<3x1x1x8xf32, #tpu.memory_space<vmem>>, vector<1x1x1x8xf32>
    %7 = vector.shape_cast %6 : vector<1x1x1x8xf32> to vector<1x8xf32>
    %8 = vector.broadcast %7 : vector<1x8xf32> to vector<8x8xf32>
    %9 = arith.addf %5, %8 : vector<8x8xf32>
    %10 = arith.truncf %9 : vector<8x8xf32> to vector<8x8xbf16>
    %c0_10 = arith.constant 0 : index
    %c0_11 = arith.constant 0 : index
    %c0_12 = arith.constant 0 : index
    %c0_13 = arith.constant 0 : index
    %c0_14 = arith.constant 0 : index
    %11 = vector.load %arg6[%c0_10, %c0_11, %c0_12, %c0_13, %c0_14] : memref<3x1x1x8x8xbf16, #tpu.memory_space<vmem>>, vector<1x1x1x8x8xbf16>
    %12 = vector.shape_cast %11 : vector<1x1x1x8x8xbf16> to vector<8x8xbf16>
    %13 = vector.shape_cast %10 : vector<8x8xbf16> to vector<1x1x1x8x8xbf16>
    tpu.vector_store %arg6[%c0_10, %c0_11, %c0_12, %c0_13, %c0_14], %13 {strides = array<i32>} : memref<3x1x1x8x8xbf16, #tpu.memory_space<vmem>>, vector<1x1x1x8x8xbf16>,
    %c1 = arith.constant 1 : index
    %c0_15 = arith.constant 0 : index
    %c0_16 = arith.constant 0 : index
    %c0_17 = arith.constant 0 : index
    %14 = vector.load %arg4[%c1, %c0_15, %c0_16, %c0_17] : memref<3x1x32x8xbf16, #tpu.memory_space<vmem>>, vector<1x1x32x8xbf16>
    %15 = vector.shape_cast %14 : vector<1x1x32x8xbf16> to vector<32x8xbf16>
    %cst_18 = arith.constant dense<0.000000e+00> : vector<8x8xf32>
    %16 = tpu.matmul %2, %15, %cst_18 {dimension_numbers = #tpu.dot_dimension_numbers<[1], [0], [0], [1], [0, 0, 1, 1], [], []>} : vector<8x32xbf16>, vector<32x8xbf16>, vector<8x8xf32> -> vector<8x8xf32>
    %c1_19 = arith.constant 1 : index
    %c0_20 = arith.constant 0 : index
    %c0_21 = arith.constant 0 : index
    %c0_22 = arith.constant 0 : index
    %17 = vector.load %arg5[%c1_19, %c0_20, %c0_21, %c0_22] : memref<3x1x1x8xf32, #tpu.memory_space<vmem>>, vector<1x1x1x8xf32>
    %18 = vector.shape_cast %17 : vector<1x1x1x8xf32> to vector<1x8xf32>
    %19 = vector.broadcast %18 : vector<1x8xf32> to vector<8x8xf32>
    %20 = arith.addf %16, %19 : vector<8x8xf32>
    %21 = arith.truncf %20 : vector<8x8xf32> to vector<8x8xbf16>
    %c1_23 = arith.constant 1 : index
    %c0_24 = arith.constant 0 : index
    %c0_25 = arith.constant 0 : index
    %c0_26 = arith.constant 0 : index
    %c0_27 = arith.constant 0 : index
    %22 = vector.load %arg6[%c1_23, %c0_24, %c0_25, %c0_26, %c0_27] : memref<3x1x1x8x8xbf16, #tpu.memory_space<vmem>>, vector<1x1x1x8x8xbf16>
    %23 = vector.shape_cast %22 : vector<1x1x1x8x8xbf16> to vector<8x8xbf16>
    %24 = vector.shape_cast %21 : vector<8x8xbf16> to vector<1x1x1x8x8xbf16>
    tpu.vector_store %arg6[%c1_23, %c0_24, %c0_25, %c0_26, %c0_27], %24 {strides = array<i32>} : memref<3x1x1x8x8xbf16, #tpu.memory_space<vmem>>, vector<1x1x1x8x8xbf16>,
    %c2 = arith.constant 2 : index
    %c0_28 = arith.constant 0 : index
    %c0_29 = arith.constant 0 : index
    %c0_30 = arith.constant 0 : index
    %25 = vector.load %arg4[%c2, %c0_28, %c0_29, %c0_30] : memref<3x1x32x8xbf16, #tpu.memory_space<vmem>>, vector<1x1x32x8xbf16>
    %26 = vector.shape_cast %25 : vector<1x1x32x8xbf16> to vector<32x8xbf16>
    %cst_31 = arith.constant dense<0.000000e+00> : vector<8x8xf32>
    %27 = tpu.matmul %2, %26, %cst_31 {dimension_numbers = #tpu.dot_dimension_numbers<[1], [0], [0], [1], [0, 0, 1, 1], [], []>} : vector<8x32xbf16>, vector<32x8xbf16>, vector<8x8xf32> -> vector<8x8xf32>
    %c2_32 = arith.constant 2 : index
    %c0_33 = arith.constant 0 : index
    %c0_34 = arith.constant 0 : index
    %c0_35 = arith.constant 0 : index
    %28 = vector.load %arg5[%c2_32, %c0_33, %c0_34, %c0_35] : memref<3x1x1x8xf32, #tpu.memory_space<vmem>>, vector<1x1x1x8xf32>
    %29 = vector.shape_cast %28 : vector<1x1x1x8xf32> to vector<1x8xf32>
    %30 = vector.broadcast %29 : vector<1x8xf32> to vector<8x8xf32>
    %31 = arith.addf %27, %30 : vector<8x8xf32>
    %32 = arith.truncf %31 : vector<8x8xf32> to vector<8x8xbf16>
    %c2_36 = arith.constant 2 : index
    %c0_37 = arith.constant 0 : index
    %c0_38 = arith.constant 0 : index
    %c0_39 = arith.constant 0 : index
    %c0_40 = arith.constant 0 : index
    %33 = vector.load %arg6[%c2_36, %c0_37, %c0_38, %c0_39, %c0_40] : memref<3x1x1x8x8xbf16, #tpu.memory_space<vmem>>, vector<1x1x1x8x8xbf16>
    %34 = vector.shape_cast %33 : vector<1x1x1x8x8xbf16> to vector<8x8xbf16>
    %35 = vector.shape_cast %32 : vector<8x8xbf16> to vector<1x1x1x8x8xbf16>
    tpu.vector_store %arg6[%c2_36, %c0_37, %c0_38, %c0_39, %c0_40], %35 {strides = array<i32>} : memref<3x1x1x8x8xbf16, #tpu.memory_space<vmem>>, vector<1x1x1x8x8xbf16>,
    return
  }
  func.func @transform_0(%arg0: i32, %arg1: i32, %arg2: i32) -> (i32, i32, i32) {
    %c0_i32 = arith.constant 0 : i32
    %c0_i32_0 = arith.constant 0 : i32
    return %arg0, %arg1, %c0_i32 : i32, i32, i32
  }
  func.func @transform_1(%arg0: i32, %arg1: i32, %arg2: i32) -> (i32, i32, i32, i32) {
    %c0_i32 = arith.constant 0 : i32
    %c0_i32_0 = arith.constant 0 : i32
    %c0_i32_1 = arith.constant 0 : i32
    %c0_i32_2 = arith.constant 0 : i32
    return %c0_i32, %arg2, %c0_i32_0, %c0_i32_1 : i32, i32, i32, i32
  }
  func.func @transform_2(%arg0: i32, %arg1: i32, %arg2: i32) -> (i32, i32, i32, i32) {
    %c0_i32 = arith.constant 0 : i32
    %c0_i32_0 = arith.constant 0 : i32
    %c0_i32_1 = arith.constant 0 : i32
    %c0_i32_2 = arith.constant 0 : i32
    return %c0_i32, %arg2, %c0_i32_0, %c0_i32_1 : i32, i32, i32, i32
  }
  func.func @transform_3(%arg0: i32, %arg1: i32, %arg2: i32) -> (i32, i32, i32, i32, i32) {
    %c0_i32 = arith.constant 0 : i32
    %c0_i32_0 = arith.constant 0 : i32
    %c0_i32_1 = arith.constant 0 : i32
    return %c0_i32, %arg0, %arg2, %arg1, %c0_i32_0 : i32, i32, i32, i32, i32
  }
}

</mosaic_0001>

<llo_original>
// kernel: tpu_custom_call.1
$region0: #{tpu_custom_call.1}
  #allocation0 [shape = 'u32[]', space=smem, size = 0x4, offset = 0x4, fixed_abs, tag = 'smem constant byte address 0x4 - core index']
  #allocation1 [shape = 'u32[144,128]{1,0:T(1,128)}', space=vmem, size = 0x12000, scoped, tag = 'internal scratch']
  %s0 = inlined_call_operand.vmem [shape: f32[2,8,32], index: 0, kind: input, shape index: {}]
  %s1 = inlined_call_operand.vmem [shape: bf16[3,4,32,8], index: 1, kind: input, shape index: {}]
  %s2 = inlined_call_operand.vmem [shape: f32[3,4,1,8], index: 2, kind: input, shape index: {}]
  %s3 = inlined_call_operand.hbm [shape: bf16[3,2,4,8,8], index: 3, kind: output, shape index: {}]
  %s4 = sld [smem:[#allocation0]]
  $region120: #{tpu_custom_call.1} parent=0
    _
  %s6 = ssub.s32 1, %s4
  %s7 = scalar_select 0, %s6, %s4
  $region1: #{tpu_custom_call.1} parent=0
    #allocation2 [shape = 'u8[49152]{0}', space=vmem, size = 0xc000, scoped, tag = 'input window, operand 1']
    #allocation3 [shape = 'u8[3072]{0}', space=vmem, size = 0xc00, scoped, tag = 'input window, operand 2']
    #allocation4 [shape = 'u8[12288]{0}', space=vmem, size = 0x3000, scoped, tag = 'output window, operand 0']
    #allocation5 [shape = 's32[2]{0}', space=sflag, size = 0x8, scoped, tag = 'scoped memory for tpu_custom_call.1']
    %8 = vsyncpa [#allocation5], 0
    %s9 = scalar_lea.sflag [#allocation5], 1
    %10 = vsyncpa %s9, 0
    loop: start=0, step=1, limit=10
    $region2: #{tpu_custom_call.1} parent=1 // loop_pre_header
      _
    $region3: #{tpu_custom_call.1} parent=1 // loop_header
      %s12 = sphi 0, %s16
      %p13 = scmp.ge.s32.totalorder %s12, 10
      %s19 = sphi 0, %s38
      %s20 = sphi 0, %s34
      %s21 = sphi 0, %s30
      %s22 = sphi 0, %s19
      %s23 = sphi 0, %s20
      %s24 = sphi 0, %s21
      %s25 = sphi 0, %s22
      %s26 = sphi 0, %s23
      %s27 = sphi 0, %s24
      %s43 = sphi 0, %s45
      %s46 = sphi 0, %s43
      %s47 = sphi 0, %s46
      %s63 = sphi 0, %s47
      %s69 = sphi 0, %s71
      %s72 = sphi 0, %s69
      %s73 = sphi 0, %s72
      %s89 = sphi 0, %s73
      %s95 = sphi 0, %s97
      %s98 = sphi 0, %s95
      %s99 = sphi 0, %s98
      %s115 = sphi 0, %s99
      %s125 = sphi 0, %s127
      %s128 = sphi 0, %s125
      %s129 = sphi 0, %s128
      %s145 = sphi 0, %s129
    $region4: #{tpu_custom_call.1} parent=1 // loop_header_branch
      %15 = sbr.rel (%p13) target = $region8
    $region5: #{tpu_custom_call.1} parent=1 // loop_body
      %s17 = ssub.s32 %s12, 1
      %s18 = ssub.s32 %s12, 2
      %s28 = sadd.s32 1, %s21
      %p29 = scmp.ge.s32.totalorder %s28, 4
      %s30 = scalar_select %p29, 0, %s28
      %s31 = sadd.s32 1, %s20
      %s32 = scalar_select %p29, %s31, %s20
      %p33 = scmp.ge.s32.totalorder %s32, 1
      %s34 = scalar_select %p33, 0, %s32
      %s35 = sadd.s32 1, %s19
      %s36 = scalar_select %p33, %s35, %s19
      %p37 = scmp.ge.s32.totalorder %s36, 2
      %s38 = scalar_select %p37, 0, %s36
      %s39 = ssub.s32 %s19, %s38
      %s40 = ssub.s32 %s20, %s34
      %s41 = sor.u32 %s39, %s40
      %p42 = scmp.eq.s32.totalorder %s41, 0
      %s44 = sadd.s32 %s43, 1
      %s45 = scalar_select %p42, %s43, %s44
      %p48 = pneg %p42
      %p49 = scmp.eq.s32.totalorder %s12, 7
      %p50 = por %p48, %p49
      %p51 = scmp.ne.s32.totalorder %s43, %s46
      %p52 = scmp.eq.s32.totalorder %s12, 0
      %p53 = por %p51, %p52
      %p54 = scmp.ne.s32.totalorder %s43, %s46
      %p55 = scmp.eq.s32.totalorder %s17, 7
      %p56 = por %p54, %p55
      %p57 = scmp.ne.s32.totalorder %s46, %s47
      %p58 = scmp.eq.s32.totalorder %s17, 0
      %p59 = por %p57, %p58
      %p60 = scmp.ne.s32.totalorder %s46, %s47
      %p61 = scmp.eq.s32.totalorder %s18, 7
      %p62 = por %p60, %p61
      %p64 = scmp.ne.s32.totalorder %s47, %s63
      %p65 = scmp.eq.s32.totalorder %s18, 0
      %p66 = por %p64, %p65
      %s67 = ssub.s32 %s21, %s30
      %p68 = scmp.eq.s32.totalorder %s67, 0
      %s70 = sadd.s32 %s69, 1
      %s71 = scalar_select %p68, %s69, %s70
      %p74 = pneg %p68
      %p75 = scmp.eq.s32.totalorder %s12, 7
      %p76 = por %p74, %p75
      %p77 = scmp.ne.s32.totalorder %s69, %s72
      %p78 = scmp.eq.s32.totalorder %s12, 0
      %p79 = por %p77, %p78
      %p80 = scmp.ne.s32.totalorder %s69, %s72
      %p81 = scmp.eq.s32.totalorder %s17, 7
      %p82 = por %p80, %p81
      %p83 = scmp.ne.s32.totalorder %s72, %s73
      %p84 = scmp.eq.s32.totalorder %s17, 0
      %p85 = por %p83, %p84
      %p86 = scmp.ne.s32.totalorder %s72, %s73
      %p87 = scmp.eq.s32.totalorder %s18, 7
      %p88 = por %p86, %p87
      %p90 = scmp.ne.s32.totalorder %s73, %s89
      %p91 = scmp.eq.s32.totalorder %s18, 0
      %p92 = por %p90, %p91
      %s93 = ssub.s32 %s21, %s30
      %p94 = scmp.eq.s32.totalorder %s93, 0
      %s96 = sadd.s32 %s95, 1
      %s97 = scalar_select %p94, %s95, %s96
      %p100 = pneg %p94
      %p101 = scmp.eq.s32.totalorder %s12, 7
      %p102 = por %p100, %p101
      %p103 = scmp.ne.s32.totalorder %s95, %s98
      %p104 = scmp.eq.s32.totalorder %s12, 0
      %p105 = por %p103, %p104
      %p106 = scmp.ne.s32.totalorder %s95, %s98
      %p107 = scmp.eq.s32.totalorder %s17, 7
      %p108 = por %p106, %p107
      %p109 = scmp.ne.s32.totalorder %s98, %s99
      %p110 = scmp.eq.s32.totalorder %s17, 0
      %p111 = por %p109, %p110
      %p112 = scmp.ne.s32.totalorder %s98, %s99
      %p113 = scmp.eq.s32.totalorder %s18, 7
      %p114 = por %p112, %p113
      %p116 = scmp.ne.s32.totalorder %s99, %s115
      %p117 = scmp.eq.s32.totalorder %s18, 0
      %p118 = por %p116, %p117
      %s119 = ssub.s32 %s19, %s38
      %s120 = ssub.s32 %s21, %s30
      %s121 = sor.u32 %s119, %s120
      %s122 = ssub.s32 %s20, %s34
      %s123 = sor.u32 %s121, %s122
      %p124 = scmp.eq.s32.totalorder %s123, 0
      %s126 = sadd.s32 %s125, 1
      %s127 = scalar_select %p124, %s125, %s126
      %p130 = pneg %p124
      %p131 = scmp.eq.s32.totalorder %s12, 7
      %p132 = por %p130, %p131
      %p133 = scmp.ne.s32.totalorder %s125, %s128
      %p134 = scmp.eq.s32.totalorder %s12, 0
      %p135 = por %p133, %p134
      %p136 = scmp.ne.s32.totalorder %s125, %s128
      %p137 = scmp.eq.s32.totalorder %s17, 7
      %p138 = por %p136, %p137
      %p139 = scmp.ne.s32.totalorder %s128, %s129
      %p140 = scmp.eq.s32.totalorder %s17, 0
      %p141 = por %p139, %p140
      %p142 = scmp.ne.s32.totalorder %s128, %s129
      %p143 = scmp.eq.s32.totalorder %s18, 7
      %p144 = por %p142, %p143
      %p146 = scmp.ne.s32.totalorder %s129, %s145
      %p147 = scmp.eq.s32.totalorder %s18, 0
      %p148 = por %p146, %p147
      %p149 = scmp.le.s32.totalorder 1, %s12
      %p150 = scmp.lt.s32.totalorder %s12, 9
      %p151 = pnand %p149, %p150
      %p152 = pneg %p151
      // Predicated region
      $region9: #{tpu_custom_call.1} parent=5 // pred_check
        _
      $region10: #{tpu_custom_call.1} parent=5 // pred_check_branch
        %154 = sbr.rel (%p151) target = $region12
      $region11: #{tpu_custom_call.1} parent=5 // pred_region
        %s155 = ssub.s32 %s12, 1
      $region12: #{tpu_custom_call.1} parent=5 // pred_fallthru
        _
      %p156 = scmp.lt.s32.totalorder %s12, 8
      // Predicated region
      $region13: #{tpu_custom_call.1} parent=5 // pred_check
        %p157 = pneg %p156
      $region14: #{tpu_custom_call.1} parent=5 // pred_check_branch
        %159 = sbr.rel (%p157) target = $region16
      $region15: #{tpu_custom_call.1} parent=5 // pred_region
        // Predicated region
        $region17: #{tpu_custom_call.1} parent=15 // pred_check
          %p160 = pneg %p53
        $region18: #{tpu_custom_call.1} parent=15 // pred_check_branch
          %162 = sbr.rel (%p160) target = $region20
        $region19: #{tpu_custom_call.1} parent=15 // pred_region
          %p163 = scmp.lt.s32.totalorder %s19, 1
          %s164 = scalar_select %p163, %s19, 1
          %p165 = scmp.lt.s32.totalorder %s20, 0
          %s166 = scalar_select %p165, %s20, 0
          %s167 = sadd.s32 %s166, %s164
          %s168 = smul.addr %s167, 8
          %s169 = scalar_lea.vmem %s0, %s168
        $region20: #{tpu_custom_call.1} parent=15 // pred_fallthru
          _
        // Predicated region
        $region21: #{tpu_custom_call.1} parent=15 // pred_check
          %p170 = pneg %p79
        $region22: #{tpu_custom_call.1} parent=15 // pred_check_branch
          %172 = sbr.rel (%p170) target = $region24
        $region23: #{tpu_custom_call.1} parent=15 // pred_region
          %s173 = sand.u32 %s69, 1
          %s174 = sand.u32 %s69, 1
          %s175 = smul.addr %s174, 48
          %s176 = scalar_lea.vmem [#allocation2], %s175
          %s177 = smul.addr %s21, 4
          %s178 = smul.addr %s177, 4
          %s179 = scalar_lea.vmem %s1, %s178
          // Predicated region
          $region25: #{tpu_custom_call.1} parent=23 // pred_check
            _
          $region26: #{tpu_custom_call.1} parent=23 // pred_check_branch
            %181 = sbr.rel (0) target = $region28
          $region27: #{tpu_custom_call.1} parent=23 // pred_region
            // Predicated region
            $region29: #{tpu_custom_call.1} parent=27 // pred_check
              _
            $region30: #{tpu_custom_call.1} parent=27 // pred_check_branch
              %183 = sbr.rel target = $region32
            $region31: #{tpu_custom_call.1} parent=27 // pred_region
              // Predicated region
              $region44: #{tpu_custom_call.1} parent=31 // pred_check
                _
              $region45: #{tpu_custom_call.1} parent=31 // pred_check_branch
                %220 = sbr.rel (0) target = $region47
              $region46: #{tpu_custom_call.1} parent=31 // pred_region
                loop: start=0, step=1, limit=1
                $region48: #{tpu_custom_call.1} parent=46 // loop_pre_header
                  _
                $region49: #{tpu_custom_call.1} parent=46 // loop_header
                  %s222 = sphi 0, %s226
                  %p223 = scmp.ge.s32.totalorder %s222, 1
                  %s227 = sphi %s179, %s179
                  %s228 = sphi %s176, %s176
                $region50: #{tpu_custom_call.1} parent=46 // loop_header_branch
                  %225 = sbr.rel (%p223) target = $region54
                $region51: #{tpu_custom_call.1} parent=46 // loop_body
                  _
                $region52: #{tpu_custom_call.1} parent=46 // loop_footer
                  %s226 = sadd.s32 1, %s222
                $region53: #{tpu_custom_call.1} parent=46 // loop_footer_branch
                  %221 = sbr.rel target = $region49
                $region54: #{tpu_custom_call.1} parent=46 // loop_exit
                  _
                loop: start=0, step=1, limit=1
                $region55: #{tpu_custom_call.1} parent=46 // loop_pre_header
                  _
                $region56: #{tpu_custom_call.1} parent=46 // loop_header
                  %s231 = sphi 0, %s235
                  %p232 = scmp.ge.s32.totalorder %s231, 1
                  %s236 = sphi %s179, %s179
                  %s237 = sphi %s176, %s176
                $region57: #{tpu_custom_call.1} parent=46 // loop_header_branch
                  %234 = sbr.rel (%p232) target = $region61
                $region58: #{tpu_custom_call.1} parent=46 // loop_body
                  %v238 = vld [vmem:[%s236] sm:$0xf]
                  %239 = vst [vmem:[%s237] sm:$0xf] %v238
                  %v240 = vld [vmem:[%s236 + $0x4] sm:$0xf]
                  %241 = vst [vmem:[%s237 + $0x4] sm:$0xf] %v240
                  %v242 = vld [vmem:[%s236 + $0x8] sm:$0xf]
                  %243 = vst [vmem:[%s237 + $0x8] sm:$0xf] %v242
                  %v244 = vld [vmem:[%s236 + $0xc] sm:$0xf]
                  %245 = vst [vmem:[%s237 + $0xc] sm:$0xf] %v244
                  %v246 = vld [vmem:[%s236 + $0x40] sm:$0xf]
                  %247 = vst [vmem:[%s237 + $0x10] sm:$0xf] %v246
                  %v248 = vld [vmem:[%s236 + $0x44] sm:$0xf]
                  %249 = vst [vmem:[%s237 + $0x14] sm:$0xf] %v248
                  %v250 = vld [vmem:[%s236 + $0x48] sm:$0xf]
                  %251 = vst [vmem:[%s237 + $0x18] sm:$0xf] %v250
                  %v252 = vld [vmem:[%s236 + $0x4c] sm:$0xf]
                  %253 = vst [vmem:[%s237 + $0x1c] sm:$0xf] %v252
                  %v254 = vld [vmem:[%s236 + $0x80] sm:$0xf]
                  %255 = vst [vmem:[%s237 + $0x20] sm:$0xf] %v254
                  %v256 = vld [vmem:[%s236 + $0x84] sm:$0xf]
                  %257 = vst [vmem:[%s237 + $0x24] sm:$0xf] %v256
                  %v258 = vld [vmem:[%s236 + $0x88] sm:$0xf]
                  %259 = vst [vmem:[%s237 + $0x28] sm:$0xf] %v258
                  %v260 = vld [vmem:[%s236 + $0x8c] sm:$0xf]
                  %261 = vst [vmem:[%s237 + $0x2c] sm:$0xf] %v260
                $region59: #{tpu_custom_call.1} parent=46 // loop_footer
                  %s235 = sadd.s32 1, %s231
                $region60: #{tpu_custom_call.1} parent=46 // loop_footer_branch
                  %230 = sbr.rel target = $region56
                $region61: #{tpu_custom_call.1} parent=46 // loop_exit
                  _
              $region47: #{tpu_custom_call.1} parent=31 // pred_fallthru
                _
            $region32: #{tpu_custom_call.1} parent=27 // pred_fallthru
              _
            // Predicated region
            $region33: #{tpu_custom_call.1} parent=27 // pred_check
              _
            $region34: #{tpu_custom_call.1} parent=27 // pred_check_branch
              %185 = sbr.rel (0) target = $region36
            $region35: #{tpu_custom_call.1} parent=27 // pred_region
              loop: start=0, step=1, limit=1
              $region37: #{tpu_custom_call.1} parent=35 // loop_pre_header
                _
              $region38: #{tpu_custom_call.1} parent=35 // loop_header
                %s188 = sphi 0, %s192
                %p189 = scmp.ge.s32.totalorder %s188, 1
                %s193 = sphi %s179, %s179
                %s194 = sphi %s176, %s176
              $region39: #{tpu_custom_call.1} parent=35 // loop_header_branch
                %191 = sbr.rel (%p189) target = $region43
              $region40: #{tpu_custom_call.1} parent=35 // loop_body
                %v195 = vld [vmem:[%s193] sm:$0xf]
                %196 = vst [vmem:[%s194] sm:$0xf] %v195
                %v197 = vld [vmem:[%s193 + $0x4] sm:$0xf]
                %198 = vst [vmem:[%s194 + $0x4] sm:$0xf] %v197
                %v199 = vld [vmem:[%s193 + $0x8] sm:$0xf]
                %200 = vst [vmem:[%s194 + $0x8] sm:$0xf] %v199
                %v201 = vld [vmem:[%s193 + $0xc] sm:$0xf]
                %202 = vst [vmem:[%s194 + $0xc] sm:$0xf] %v201
                %v203 = vld [vmem:[%s193 + $0x40] sm:$0xf]
                %204 = vst [vmem:[%s194 + $0x10] sm:$0xf] %v203
                %v205 = vld [vmem:[%s193 + $0x44] sm:$0xf]
                %206 = vst [vmem:[%s194 + $0x14] sm:$0xf] %v205
                %v207 = vld [vmem:[%s193 + $0x48] sm:$0xf]
                %208 = vst [vmem:[%s194 + $0x18] sm:$0xf] %v207
                %v209 = vld [vmem:[%s193 + $0x4c] sm:$0xf]
                %210 = vst [vmem:[%s194 + $0x1c] sm:$0xf] %v209
                %v211 = vld [vmem:[%s193 + $0x80] sm:$0xf]
                %212 = vst [vmem:[%s194 + $0x20] sm:$0xf] %v211
                %v213 = vld [vmem:[%s193 + $0x84] sm:$0xf]
                %214 = vst [vmem:[%s194 + $0x24] sm:$0xf] %v213
                %v215 = vld [vmem:[%s193 + $0x88] sm:$0xf]
                %216 = vst [vmem:[%s194 + $0x28] sm:$0xf] %v215
                %v217 = vld [vmem:[%s193 + $0x8c] sm:$0xf]
                %218 = vst [vmem:[%s194 + $0x2c] sm:$0xf] %v217
              $region41: #{tpu_custom_call.1} parent=35 // loop_footer
                %s192 = sadd.s32 1, %s188
              $region42: #{tpu_custom_call.1} parent=35 // loop_footer_branch
                %187 = sbr.rel target = $region38
              $region43: #{tpu_custom_call.1} parent=35 // loop_exit
                _
            $region36: #{tpu_custom_call.1} parent=27 // pred_fallthru
              _
          $region28: #{tpu_custom_call.1} parent=23 // pred_fallthru
            _
          %262 = vnop
        $region24: #{tpu_custom_call.1} parent=15 // pred_fallthru
          _
        // Predicated region
        $region62: #{tpu_custom_call.1} parent=15 // pred_check
          %p263 = pneg %p105
        $region63: #{tpu_custom_call.1} parent=15 // pred_check_branch
          %265 = sbr.rel (%p263) target = $region65
        $region64: #{tpu_custom_call.1} parent=15 // pred_region
          %s266 = sand.u32 %s95, 1
          %s267 = sand.u32 %s95, 1
          %s268 = smul.addr %s267, 3
          %s269 = scalar_lea.vmem [#allocation3], %s268
          %s270 = scalar_lea.vmem %s2, %s21
          // Predicated region
          $region66: #{tpu_custom_call.1} parent=64 // pred_check
            _
          $region67: #{tpu_custom_call.1} parent=64 // pred_check_branch
            %272 = sbr.rel (0) target = $region69
          $region68: #{tpu_custom_call.1} parent=64 // pred_region
            // Predicated region
            $region70: #{tpu_custom_call.1} parent=68 // pred_check
              _
            $region71: #{tpu_custom_call.1} parent=68 // pred_check_branch
              %274 = sbr.rel target = $region73
            $region72: #{tpu_custom_call.1} parent=68 // pred_region
              // Predicated region
              $region85: #{tpu_custom_call.1} parent=72 // pred_check
                _
              $region86: #{tpu_custom_call.1} parent=72 // pred_check_branch
                %293 = sbr.rel (0) target = $region88
              $region87: #{tpu_custom_call.1} parent=72 // pred_region
                loop: start=0, step=1, limit=1
                $region89: #{tpu_custom_call.1} parent=87 // loop_pre_header
                  _
                $region90: #{tpu_custom_call.1} parent=87 // loop_header
                  %s296 = sphi 0, %s300
                  %p297 = scmp.ge.s32.totalorder %s296, 1
                  %s301 = sphi %s270, %s270
                  %s302 = sphi %s269, %s269
                $region91: #{tpu_custom_call.1} parent=87 // loop_header_branch
                  %299 = sbr.rel (%p297) target = $region95
                $region92: #{tpu_custom_call.1} parent=87 // loop_body
                  %v303 = vld [vmem:[%s301] sm:$0x1]
                  %304 = vst [vmem:[%s302] sm:$0x1] %v303
                  %v305 = vld [vmem:[%s301 + $0x4] sm:$0x1]
                  %306 = vst [vmem:[%s302 + $0x1] sm:$0x1] %v305
                  %v307 = vld [vmem:[%s301 + $0x8] sm:$0x1]
                  %308 = vst [vmem:[%s302 + $0x2] sm:$0x1] %v307
                $region93: #{tpu_custom_call.1} parent=87 // loop_footer
                  %s300 = sadd.s32 1, %s296
                $region94: #{tpu_custom_call.1} parent=87 // loop_footer_branch
                  %295 = sbr.rel target = $region90
                $region95: #{tpu_custom_call.1} parent=87 // loop_exit
                  _
              $region88: #{tpu_custom_call.1} parent=72 // pred_fallthru
                _
            $region73: #{tpu_custom_call.1} parent=68 // pred_fallthru
              _
            // Predicated region
            $region74: #{tpu_custom_call.1} parent=68 // pred_check
              _
            $region75: #{tpu_custom_call.1} parent=68 // pred_check_branch
              %276 = sbr.rel (0) target = $region77
            $region76: #{tpu_custom_call.1} parent=68 // pred_region
              loop: start=0, step=1, limit=1
              $region78: #{tpu_custom_call.1} parent=76 // loop_pre_header
                _
              $region79: #{tpu_custom_call.1} parent=76 // loop_header
                %s279 = sphi 0, %s283
                %p280 = scmp.ge.s32.totalorder %s279, 1
                %s284 = sphi %s270, %s270
                %s285 = sphi %s269, %s269
              $region80: #{tpu_custom_call.1} parent=76 // loop_header_branch
                %282 = sbr.rel (%p280) target = $region84
              $region81: #{tpu_custom_call.1} parent=76 // loop_body
                %v286 = vld [vmem:[%s284] sm:$0x1]
                %287 = vst [vmem:[%s285] sm:$0x1] %v286
                %v288 = vld [vmem:[%s284 + $0x4] sm:$0x1]
                %289 = vst [vmem:[%s285 + $0x1] sm:$0x1] %v288
                %v290 = vld [vmem:[%s284 + $0x8] sm:$0x1]
                %291 = vst [vmem:[%s285 + $0x2] sm:$0x1] %v290
              $region82: #{tpu_custom_call.1} parent=76 // loop_footer
                %s283 = sadd.s32 1, %s279
              $region83: #{tpu_custom_call.1} parent=76 // loop_footer_branch
                %278 = sbr.rel target = $region79
              $region84: #{tpu_custom_call.1} parent=76 // loop_exit
                _
            $region77: #{tpu_custom_call.1} parent=68 // pred_fallthru
              _
          $region69: #{tpu_custom_call.1} parent=64 // pred_fallthru
            _
          %309 = vnop
        $region65: #{tpu_custom_call.1} parent=15 // pred_fallthru
          _
      $region16: #{tpu_custom_call.1} parent=5 // pred_fallthru
        _
      %p310 = scmp.le.s32.totalorder 1, %s12
      %p311 = scmp.lt.s32.totalorder %s12, 9
      %p312 = pnand %p310, %p311
      %p313 = pneg %p312
      // Predicated region
      $region96: #{tpu_custom_call.1} parent=5 // pred_check
        _
      $region97: #{tpu_custom_call.1} parent=5 // pred_check_branch
        %315 = sbr.rel (%p312) target = $region99
      $region98: #{tpu_custom_call.1} parent=5 // pred_region
        %s316 = ssub.s32 %s12, 1
        %s317 = sand.u32 %s72, 1
        %s318 = sand.u32 %s72, 1
        %s319 = smul.addr %s318, 48
        %s320 = scalar_lea.vmem [#allocation2], %s319
        // Predicated region
        $region100: #{tpu_custom_call.1} parent=98 // pred_check
          %p321 = pneg %p85
        $region101: #{tpu_custom_call.1} parent=98 // pred_check_branch
          %323 = sbr.rel (%p321) target = $region103
        $region102: #{tpu_custom_call.1} parent=98 // pred_region
          _
        $region103: #{tpu_custom_call.1} parent=98 // pred_fallthru
          _
        %s324 = sand.u32 %s98, 1
        %s325 = sand.u32 %s98, 1
        %s326 = smul.addr %s325, 3
        %s327 = scalar_lea.vmem [#allocation3], %s326
        // Predicated region
        $region104: #{tpu_custom_call.1} parent=98 // pred_check
          %p328 = pneg %p111
        $region105: #{tpu_custom_call.1} parent=98 // pred_check_branch
          %330 = sbr.rel (%p328) target = $region107
        $region106: #{tpu_custom_call.1} parent=98 // pred_region
          _
        $region107: #{tpu_custom_call.1} parent=98 // pred_fallthru
          _
        %p331 = scmp.lt.s32.totalorder %s22, 1
        %s332 = scalar_select %p331, %s22, 1
        %p333 = scmp.lt.s32.totalorder %s23, 0
        %s334 = scalar_select %p333, %s23, 0
        %s335 = sadd.s32 %s334, %s332
        %s336 = smul.addr %s335, 8
        %s337 = scalar_lea.vmem %s0, %s336
        %p338 = pneg %p59
        %p339 = pneg %p56
        %s340 = sand.u32 %s72, 1
        %s341 = sand.u32 %s72, 1
        %s342 = smul.addr %s341, 48
        %s343 = scalar_lea.vmem [#allocation2], %s342
        %p344 = pneg %p85
        %p345 = pneg %p82
        %s346 = sand.u32 %s98, 1
        %s347 = sand.u32 %s98, 1
        %s348 = smul.addr %s347, 3
        %s349 = scalar_lea.vmem [#allocation3], %s348
        %p350 = pneg %p111
        %p351 = pneg %p108
        %p352 = pneg %p141
        %p353 = pneg %p138
        %s354 = sand.u32 %s128, 1
        %s355 = scalar_lea.sflag [#allocation5], %s354
        %s356 = sand.u32 %s128, 1
        %s357 = smul.addr %s356, 12
        %s358 = scalar_lea.vmem [#allocation4], %s357
        %p359 = scmp.lt.s32.totalorder %s22, 1
        %s360 = scalar_select %p359, %s22, 1
        %p361 = scmp.lt.s32.totalorder %s23, 0
        %s362 = scalar_select %p361, %s23, 0
        %s363 = sadd.s32 %s362, %s360
        %s364 = smul.addr %s363, 8
        %s365 = scalar_lea.vmem %s0, %s364
        %v367 = vld [vmem:[%s365] sm:$0xff]
        %v368 = vpack.c.bf16 %v367, %v367
        %v369 = vld [vmem:[%s320] sm:$0xf]
        %v370 = vld [vmem:[%s320 + $0x4] sm:$0xf]
        %v371 = vld [vmem:[%s320 + $0x8] sm:$0xf]
        %v372 = vld [vmem:[%s320 + $0xc] sm:$0xf]
        %v373 = vld [vmem:[%s327] sm:$0x1]
        %v375 = vlaneseq
        %v376 = vshrl.u32 %v375, 7
        %v377 = vsub.s32 0, %v376
        %v378 = vrot.slane %v373, %v377
        %v384 = vunpack.c.l.b16 %v369
        %v385 = vunpack.c.l.b16 %v370
        %v386 = vunpack.c.l.b16 %v371
        %v387 = vunpack.c.l.b16 %v372
        %v388 = vpack.c.b16 %v385, %v384
        %v389 = vpack.c.b16 %v387, %v386
        %vm392 = vcmask 261120
        %v394 = vsel %vm392, %v368, 0
        %396 = vmatprep.subr.bf16.mxu0 0
        %397 = vmatpush1.bf16.msra.mxu0 %v388
        %398 = vmatprep.subr.bf16.mxu0 0
        %399 = vmatpush1.bf16.msra.mxu0 %v389
        %400 = vmatprep.subr.bf16.mxu0 0
        %401 = vmatpush1.bf16.msra.mxu0 0
        %402 = vmatprep.subr.bf16.mxu0 0
        %403 = vmatpush1.bf16.msra.mxu0 0
        %404 = vmatprep.subr.bf16.mxu0 0
        %405 = vmatpush1.bf16.msra.mxu0 0
        %406 = vmatprep.subr.bf16.mxu0 0
        %407 = vmatpush1.bf16.msra.mxu0 0
        %408 = vmatprep.subr.bf16.mxu0 0
        %409 = vmatpush1.bf16.msra.mxu0 0
        %410 = vmatprep.subr.bf16.mxu0 0
        %411 = vmatpush1.bf16.msra.mxu0 0
        %412 = vmatprep.subr.bf16.mxu0 0
        %413 = vmatpush1.bf16.msra.mxu0 0
        %414 = vmatprep.subr.bf16.mxu0 0
        %415 = vmatpush1.bf16.msra.mxu0 0
        %416 = vmatprep.subr.bf16.mxu0 0
        %417 = vmatpush1.bf16.msra.mxu0 0
        %418 = vmatprep.subr.bf16.mxu0 0
        %419 = vmatpush1.bf16.msra.mxu0 0
        %420 = vmatprep.subr.bf16.mxu0 0
        %421 = vmatpush1.bf16.msra.mxu0 0
        %422 = vmatprep.subr.bf16.mxu0 0
        %423 = vmatpush1.bf16.msra.mxu0 0
        %424 = vmatprep.subr.bf16.mxu0 0
        %425 = vmatpush1.bf16.msra.mxu0 0
        %426 = vmatprep.subr.bf16.mxu0 0
        %427 = vmatpush1.bf16.msra.mxu0 0
        %428 = vmatprep.mubr.bf16.mxu0 0
        %429 = vmatmul.mubr.bf16.gmra.mrb[0].mxu0 %v394
        %v430 = vpop.f32.mrb[0].mxu0
        %v431 = vadd.f32 %v378, %v430
        %v432 = vpop.f32.mrb[0].mxu0
        %v433 = vpop.f32.mrb[0].mxu0
        %v434 = vpop.f32.mrb[0].mxu0
        %435 = vdwg.mxu0
        %v436 = vpack.c.bf16 %v431, %v431
        %vm437 = vcmask 60416
        %438 = vst.msk [vmem:[%s358] sm:$0xf] %vm437, %v436
        %s439 = scalar_lea.vmem %s320, 16 [#allocation2]
        %v440 = vld [vmem:[%s439] sm:$0xf]
        %v441 = vld [vmem:[%s439 + $0x4] sm:$0xf]
        %v442 = vld [vmem:[%s439 + $0x8] sm:$0xf]
        %v443 = vld [vmem:[%s439 + $0xc] sm:$0xf]
        %s444 = scalar_lea.vmem %s327, 1 [#allocation3]
        %v445 = vld [vmem:[%s444] sm:$0x1]
        %v447 = vlaneseq
        %v448 = vshrl.u32 %v447, 7
        %v449 = vsub.s32 0, %v448
        %v450 = vrot.slane %v445, %v449
        %v456 = vunpack.c.l.b16 %v440
        %v457 = vunpack.c.l.b16 %v441
        %v458 = vunpack.c.l.b16 %v442
        %v459 = vunpack.c.l.b16 %v443
        %v460 = vpack.c.b16 %v457, %v456
        %v461 = vpack.c.b16 %v459, %v458
        %464 = vmatprep.subr.bf16.mxu0 0
        %465 = vmatpush1.bf16.msra.mxu0 %v460
        %466 = vmatprep.subr.bf16.mxu0 0
        %467 = vmatpush1.bf16.msra.mxu0 %v461
        %468 = vmatprep.subr.bf16.mxu0 0
        %469 = vmatpush1.bf16.msra.mxu0 0
        %470 = vmatprep.subr.bf16.mxu0 0
        %471 = vmatpush1.bf16.msra.mxu0 0
        %472 = vmatprep.subr.bf16.mxu0 0
        %473 = vmatpush1.bf16.msra.mxu0 0
        %474 = vmatprep.subr.bf16.mxu0 0
        %475 = vmatpush1.bf16.msra.mxu0 0
        %476 = vmatprep.subr.bf16.mxu0 0
        %477 = vmatpush1.bf16.msra.mxu0 0
        %478 = vmatprep.subr.bf16.mxu0 0
        %479 = vmatpush1.bf16.msra.mxu0 0
        %480 = vmatprep.subr.bf16.mxu0 0
        %481 = vmatpush1.bf16.msra.mxu0 0
        %482 = vmatprep.subr.bf16.mxu0 0
        %483 = vmatpush1.bf16.msra.mxu0 0
        %484 = vmatprep.subr.bf16.mxu0 0
        %485 = vmatpush1.bf16.msra.mxu0 0
        %486 = vmatprep.subr.bf16.mxu0 0
        %487 = vmatpush1.bf16.msra.mxu0 0
        %488 = vmatprep.subr.bf16.mxu0 0
        %489 = vmatpush1.bf16.msra.mxu0 0
        %490 = vmatprep.subr.bf16.mxu0 0
        %491 = vmatpush1.bf16.msra.mxu0 0
        %492 = vmatprep.subr.bf16.mxu0 0
        %493 = vmatpush1.bf16.msra.mxu0 0
        %494 = vmatprep.subr.bf16.mxu0 0
        %495 = vmatpush1.bf16.msra.mxu0 0
        %496 = vmatprep.mubr.bf16.mxu0 0
        %497 = vmatmul.mubr.bf16.gmra.mrb[0].mxu0 %v394
        %v498 = vpop.f32.mrb[0].mxu0
        %v499 = vadd.f32 %v450, %v498
        %v500 = vpop.f32.mrb[0].mxu0
        %v501 = vpop.f32.mrb[0].mxu0
        %v502 = vpop.f32.mrb[0].mxu0
        %503 = vdwg.mxu0
        %v504 = vpack.c.bf16 %v499, %v499
        %s505 = scalar_lea.vmem %s358, 4 [#allocation4]
        %506 = vst.msk [vmem:[%s505] sm:$0xf] %vm437, %v504
        %s507 = scalar_lea.vmem %s320, 32 [#allocation2]
        %v508 = vld [vmem:[%s507] sm:$0xf]
        %v509 = vld [vmem:[%s507 + $0x4] sm:$0xf]
        %v510 = vld [vmem:[%s507 + $0x8] sm:$0xf]
        %v511 = vld [vmem:[%s507 + $0xc] sm:$0xf]
        %s512 = scalar_lea.vmem %s327, 2 [#allocation3]
        %v513 = vld [vmem:[%s512] sm:$0x1]
        %v515 = vlaneseq
        %v516 = vshrl.u32 %v515, 7
        %v517 = vsub.s32 0, %v516
        %v518 = vrot.slane %v513, %v517
        %v524 = vunpack.c.l.b16 %v508
        %v525 = vunpack.c.l.b16 %v509
        %v526 = vunpack.c.l.b16 %v510
        %v527 = vunpack.c.l.b16 %v511
        %v528 = vpack.c.b16 %v525, %v524
        %v529 = vpack.c.b16 %v527, %v526
        %532 = vmatprep.subr.bf16.mxu0 0
        %533 = vmatpush1.bf16.msra.mxu0 %v528
        %534 = vmatprep.subr.bf16.mxu0 0
        %535 = vmatpush1.bf16.msra.mxu0 %v529
        %536 = vmatprep.subr.bf16.mxu0 0
        %537 = vmatpush1.bf16.msra.mxu0 0
        %538 = vmatprep.subr.bf16.mxu0 0
        %539 = vmatpush1.bf16.msra.mxu0 0
        %540 = vmatprep.subr.bf16.mxu0 0
        %541 = vmatpush1.bf16.msra.mxu0 0
        %542 = vmatprep.subr.bf16.mxu0 0
        %543 = vmatpush1.bf16.msra.mxu0 0
        %544 = vmatprep.subr.bf16.mxu0 0
        %545 = vmatpush1.bf16.msra.mxu0 0
        %546 = vmatprep.subr.bf16.mxu0 0
        %547 = vmatpush1.bf16.msra.mxu0 0
        %548 = vmatprep.subr.bf16.mxu0 0
        %549 = vmatpush1.bf16.msra.mxu0 0
        %550 = vmatprep.subr.bf16.mxu0 0
        %551 = vmatpush1.bf16.msra.mxu0 0
        %552 = vmatprep.subr.bf16.mxu0 0
        %553 = vmatpush1.bf16.msra.mxu0 0
        %554 = vmatprep.subr.bf16.mxu0 0
        %555 = vmatpush1.bf16.msra.mxu0 0
        %556 = vmatprep.subr.bf16.mxu0 0
        %557 = vmatpush1.bf16.msra.mxu0 0
        %558 = vmatprep.subr.bf16.mxu0 0
        %559 = vmatpush1.bf16.msra.mxu0 0
        %560 = vmatprep.subr.bf16.mxu0 0
        %561 = vmatpush1.bf16.msra.mxu0 0
        %562 = vmatprep.subr.bf16.mxu0 0
        %563 = vmatpush1.bf16.msra.mxu0 0
        %564 = vmatprep.mubr.bf16.mxu0 0
        %565 = vmatmul.mubr.bf16.gmra.mrb[0].mxu0 %v394
        %v566 = vpop.f32.mrb[0].mxu0
        %v567 = vadd.f32 %v518, %v566
        %v568 = vpop.f32.mrb[0].mxu0
        %v569 = vpop.f32.mrb[0].mxu0
        %v570 = vpop.f32.mrb[0].mxu0
        %571 = vdwg.mxu0
        %v572 = vpack.c.bf16 %v567, %v567
        %s573 = scalar_lea.vmem %s358, 8 [#allocation4]
        %574 = vst.msk [vmem:[%s573] sm:$0xf] %vm437, %v572
        %s575 = sand.u32 %s128, 1
        %s576 = scalar_lea.sflag [#allocation5], %s575
        %s577 = sand.u32 %s128, 1
        %s578 = smul.addr %s577, 12
        %s579 = scalar_lea.vmem [#allocation4], %s578
        // Predicated region
        $region108: #{tpu_custom_call.1} parent=98 // pred_check
          %p580 = pneg %p138
        $region109: #{tpu_custom_call.1} parent=98 // pred_check_branch
          %582 = sbr.rel (%p580) target = $region111
        $region110: #{tpu_custom_call.1} parent=98 // pred_region
          %s584 = ssub.s32 192, 192
          %585 = vsyncadd %s576, %s584
          %s586 = sadd.s32 %s23, %s24
          %s587 = smul.addr %s22, 4
          %s588 = sadd.s32 %s586, %s587
          %s589 = smul.addr %s588, 64
          %s590 = scalar_lea.hbm %s3, %s589
          %s591 = sshll.u32 %s579, 4
          %s592 = int_to_ptr.vmem [resolvable:$true] %s591
          %597 = dma.vmem_to_hbm [thread:$0]  %s592, 192, %s590, %s576, 64, 512, 4
        $region111: #{tpu_custom_call.1} parent=98 // pred_fallthru
          _
      $region99: #{tpu_custom_call.1} parent=5 // pred_fallthru
        _
      %p598 = scmp.le.s32.totalorder 2, %s12
      // Predicated region
      $region112: #{tpu_custom_call.1} parent=5 // pred_check
        %p599 = pneg %p598
      $region113: #{tpu_custom_call.1} parent=5 // pred_check_branch
        %601 = sbr.rel (%p599) target = $region115
      $region114: #{tpu_custom_call.1} parent=5 // pred_region
        %s602 = ssub.s32 %s12, 2
        // Predicated region
        $region116: #{tpu_custom_call.1} parent=114 // pred_check
          %p603 = pneg %p144
        $region117: #{tpu_custom_call.1} parent=114 // pred_check_branch
          %605 = sbr.rel (%p603) target = $region119
        $region118: #{tpu_custom_call.1} parent=114 // pred_region
          %s606 = sand.u32 %s129, 1
          %s607 = scalar_lea.sflag [#allocation5], %s606
          %s608 = sand.u32 %s129, 1
          %s609 = smul.addr %s608, 12
          %s610 = scalar_lea.vmem [#allocation4], %s609
          %611 = dma.done %s607, 192
        $region119: #{tpu_custom_call.1} parent=114 // pred_fallthru
          _
      $region115: #{tpu_custom_call.1} parent=5 // pred_fallthru
        _
    $region6: #{tpu_custom_call.1} parent=1 // loop_footer
      %s16 = sadd.s32 1, %s12
    $region7: #{tpu_custom_call.1} parent=1 // loop_footer_branch
      %11 = sbr.rel target = $region3
    $region8: #{tpu_custom_call.1} parent=1 // loop_exit
      _
    %612 = vsyncpa [#allocation5], 1
    %s613 = scalar_lea.sflag [#allocation5], 1
    %614 = vsyncpa %s613, 1

</llo_original>
